<compile_context>
chip_gen: v5e
topology: v5e:2x2
jax: 0.10.0
libtpu: 0.0.40
codegen_flags: <defaults>
</compile_context>

<pallas_src>
import numpy as np
import jax
import jax.numpy as jnp
from jax.experimental import pallas as pl
from jax.experimental.pallas import tpu as pltpu

HALF = jnp.bfloat16  # TPU-native stand-in for torch .half()  # TODO(synk): torch uses fp16; bf16 differs at ~1e-2.


def vnet_kernel(x_ref, w1_ref, b1_ref, w2_ref, b2_ref, out_ref):
    """One grid step == one VNet.forward request.

    x_ref   : (1, 2*F)  bf16  lanes [0:F] = g1.flatten(), lanes [F:2F] = g_other.flatten()
                              (zero-padded per segment if the branch is narrower than F)
    w1_ref  : (2*F, H)  bf16  first Linear weight, pre-transposed + padded
    b1_ref  : (1, H)    f32
    w2_ref  : (H, F)    bf16  second Linear weight with repeat_interleave(2,-1) folded in
    b2_ref  : (1, F)    f32   repeat-interleaved bias
    out_ref : (1, F)    bf16  flat (lane-dense) output; wrapper reshapes to (d1, d2)
    """
    f_pad = out_ref.shape[-1]
    x = x_ref[...]                                                   # (1, 2*F) bf16

    # h = Sigmoid(Linear1(cat(g1, g_other).reshape(1,-1)))  -- single K=2*F MXU matmul
    h = jax.nn.sigmoid(
        jnp.dot(x, w1_ref[...], preferred_element_type=jnp.float32) + b1_ref[...]
    )                                                                # (1, H) f32

    # gamma = sigmoid(Linear2(h)) with repeat_interleave(2,-1) pre-folded into W2/b2,
    # so gamma comes out already flat at width F = d1*d2.
    gamma = jax.nn.sigmoid(
        jnp.dot(h.astype(jnp.bfloat16), w2_ref[...],
                preferred_element_type=jnp.float32) + b2_ref[...]
    )                                                                # (1, F) f32

    # out = g1 + gamma * g_other * 2   (f32 math, cast to half only at the store)
    g1 = x[:, :f_pad].astype(jnp.float32)
    g2 = x[:, f_pad:].astype(jnp.float32)
    out_ref[...] = (g1 + gamma * g2 * 2.0).astype(out_ref.dtype)


def make_mlp_params(key, ctx_dim, n_ctx, pad_ctx_dim):
    """nn.Linear-style init; weights stored pre-transposed, padded, bf16, R folded into W2."""
    # repeat_interleave(2,-1).reshape(d1,d2) is only valid when n_ctx == 2 (2*ctx_dim == d1*d2)
    assert n_ctx == 2, "VNet's repeat_interleave(2,-1).reshape(d1,d2) requires n_ctx == 2"
    assert pad_ctx_dim >= ctx_dim and pad_ctx_dim % 128 == 0

    in_dim = ctx_dim * 2 * n_ctx
    f0 = n_ctx * ctx_dim          # flat size of one gradient tensor (== 2*ctx_dim)
    f_pad = n_ctx * pad_ctx_dim
    k_pad = 2 * f_pad
    h_pad = pad_ctx_dim

    k1, k2, k3, k4 = jax.random.split(key, 4)
    lim1 = 1.0 / np.sqrt(in_dim)
    lim2 = 1.0 / np.sqrt(ctx_dim)
    w1 = jax.random.uniform(k1, (ctx_dim, in_dim), jnp.float32, -lim1, lim1)   # (out, in)
    b1 = jax.random.uniform(k2, (ctx_dim,), jnp.float32, -lim1, lim1)
    w2 = jax.random.uniform(k3, (ctx_dim, ctx_dim), jnp.float32, -lim2, lim2)
    b2 = jax.random.uniform(k4, (ctx_dim,), jnp.float32, -lim2, lim2)

    # --- kernel-side packed / padded tensors ---
    w1t = w1.T                                       # (in_dim, ctx_dim); rows: [g1 flat | g2 flat]
    w1_k = jnp.zeros((k_pad, h_pad), jnp.float32)
    w1_k = w1_k.at[:f0, :ctx_dim].set(w1t[:f0])
    w1_k = w1_k.at[f_pad:f_pad + f0, :ctx_dim].set(w1t[f0:])
    b1_k = jnp.zeros((1, h_pad), jnp.float32).at[0, :ctx_dim].set(b1)

    # Fold repeat_interleave(2,-1) into W2 / b2 (sigmoid commutes with duplication).
    w2t_rep = jnp.repeat(w2.T, 2, axis=1)            # (ctx_dim, 2*ctx_dim) == (ctx_dim, f0)
    b2_rep = jnp.repeat(b2, 2)                       # (f0,)
    w2_k = jnp.zeros((h_pad, f_pad), jnp.float32).at[:ctx_dim, :f0].set(w2t_rep)
    b2_k = jnp.zeros((1, f_pad), jnp.float32).at[0, :f0].set(b2_rep)

    return dict(
        ctx_dim=ctx_dim, n_ctx=n_ctx, f0=f0, f_pad=f_pad, k_pad=k_pad, h_pad=h_pad,
        w1_k=w1_k.astype(HALF), b1_k=b1_k, w2_k=w2_k.astype(HALF), b2_k=b2_k,
        # unpadded f32 copies, only used by the pure-JAX reference check
        w1t=w1t, b1=b1.reshape(1, -1), w2t=w2.T, b2=b2.reshape(1, -1),
    )


def _select_params(params, param_name):
    if "image_encoder" in param_name:
        return params["vision"]
    if "text_encoder" in param_name or param_name == "prompt_learner.ctx":
        return params["text"]
    raise ValueError(param_name)


def vnet_forward_batched(params, requests):
    """Run MANY VNet.forward requests in ONE pallas_call.

    requests: list of (gradients1, gradients2, gradients3, param_name), mirroring
    VNet.forward's signature (exactly one of gradients2/gradients3 is None).
    Returns a list of (d1, d2) bf16 outputs in request order.
    """
    ps, xs, shapes = [], [], []
    for g1, g2, g3, name in requests:
        p = _select_params(params, name)
        if g2 is None:
            other = g3
        elif g3 is None:
            other = g2
        else:
            raise NotImplementedError
        d1, d2 = g1.shape
        assert d1 == p["n_ctx"] and d2 == p["ctx_dim"], (d1, d2, p["n_ctx"], p["ctx_dim"])
        f0, f_pad = p["f0"], p["f_pad"]
        # Flatten + concatenate on the lane axis (zero-padded per segment).
        x = jnp.zeros((1, 2 * f_pad), HALF)
        x = x.at[:, :f0].set(g1.reshape(1, f0).astype(HALF))
        x = x.at[:, f_pad:f_pad + f0].set(other.reshape(1, f0).astype(HALF))
        ps.append(p)
        xs.append(x)
        shapes.append((d1, d2, f0))

    n = len(requests)
    k_pad, h_pad, f_pad = ps[0]["k_pad"], ps[0]["h_pad"], ps[0]["f_pad"]
    assert all(p["k_pad"] == k_pad and p["h_pad"] == h_pad and p["f_pad"] == f_pad for p in ps)

    x_all = jnp.stack(xs)                                  # (n, 1, 2*F)  bf16
    w1_all = jnp.stack([p["w1_k"] for p in ps])            # (n, 2*F, H)  bf16
    b1_all = jnp.stack([p["b1_k"] for p in ps])            # (n, 1, H)    f32
    w2_all = jnp.stack([p["w2_k"] for p in ps])            # (n, H, F)    bf16
    b2_all = jnp.stack([p["b2_k"] for p in ps])            # (n, 1, F)    f32

    out_all = pl.pallas_call(
        vnet_kernel,
        out_shape=jax.ShapeDtypeStruct((n, 1, f_pad), HALF),
        grid=(n,),
        in_specs=[
            pl.BlockSpec((None, 1, k_pad), lambda i: (i, 0, 0)),
            pl.BlockSpec((None, k_pad, h_pad), lambda i: (i, 0, 0)),
            pl.BlockSpec((None, 1, h_pad), lambda i: (i, 0, 0)),
            pl.BlockSpec((None, h_pad, f_pad), lambda i: (i, 0, 0)),
            pl.BlockSpec((None, 1, f_pad), lambda i: (i, 0, 0)),
        ],
        out_specs=pl.BlockSpec((None, 1, f_pad), lambda i: (i, 0, 0)),
        compiler_params=pltpu.CompilerParams(dimension_semantics=("parallel",)),
    )(x_all, w1_all, b1_all, w2_all, b2_all)

    return [out_all[i, 0, :f0].reshape(d1, d2) for i, (d1, d2, f0) in enumerate(shapes)]


def vnet_forward(params, gradients1, gradients2, gradients3, param_name):
    """Single-request convenience mirroring VNet.forward exactly."""
    return vnet_forward_batched(params, [(gradients1, gradients2, gradients3, param_name)])[0]


def vnet_reference(p, g1, g_other):
    """Pure-JAX reference of the original torch math (f32 MLP, half epilogue)."""
    d1, d2 = g1.shape
    x = jnp.concatenate([g1, g_other], axis=0).astype(jnp.float32).reshape(1, -1)
    h = jax.nn.sigmoid(x @ p["w1t"] + p["b1"])
    gamma = jax.nn.sigmoid(h @ p["w2t"] + p["b2"])
    gamma_t = jnp.repeat(gamma, 2, axis=-1).reshape(d1, d2).astype(HALF)
    return g1 + gamma_t * g_other * 2


if __name__ == "__main__":
    key = jax.random.PRNGKey(0)
    kp_v, kp_t, kg = jax.random.split(key, 3)

    N_CTX_TEXT = 2
    N_CTX_VISION = 2
    TEXT_CTX_DIM = 128
    VISION_CTX_DIM = 64
    PAD_CTX_DIM = 128   # vision padded up to the text lane width so both share one kernel shape

    params = {
        "vision": make_mlp_params(kp_v, VISION_CTX_DIM, N_CTX_VISION, PAD_CTX_DIM),
        "text": make_mlp_params(kp_t, TEXT_CTX_DIM, N_CTX_TEXT, PAD_CTX_DIM),
    }

    kg1, kg2, kg3, kg4 = jax.random.split(kg, 4)
    g1_text = (0.1 * jax.random.normal(kg1, (N_CTX_TEXT, TEXT_CTX_DIM))).astype(HALF)
    g3_text = (0.1 * jax.random.normal(kg2, (N_CTX_TEXT, TEXT_CTX_DIM))).astype(HALF)
    g1_vis = (0.1 * jax.random.normal(kg3, (N_CTX_VISION, VISION_CTX_DIM))).astype(HALF)
    g2_vis = (0.1 * jax.random.normal(kg4, (N_CTX_VISION, VISION_CTX_DIM))).astype(HALF)

    # Both branches (text: forward(g1, None, g3, 'prompt_learner.ctx');
    # vision: forward(g1, g2, None, 'image_encoder.VPT')) fused into ONE pallas_call.
    out_text, out_vis = vnet_forward_batched(
        params,
        [(g1_text, None, g3_text, "prompt_learner.ctx"),
         (g1_vis, g2_vis, None, "image_encoder.VPT")],
    )
    # Single-request path (mirrors VNet.forward signature) also exercised.
    out_text_single = vnet_forward(params, g1_text, None, g3_text, "prompt_learner.ctx")
    jax.block_until_ready((out_text, out_vis, out_text_single))

    ref_text = vnet_reference(params["text"], g1_text, g3_text)
    ref_vis = vnet_reference(params["vision"], g1_vis, g2_vis)
    np.testing.assert_allclose(np.asarray(out_text, np.float32),
                               np.asarray(ref_text, np.float32), atol=2e-2, rtol=2e-2)
    np.testing.assert_allclose(np.asarray(out_vis, np.float32),
                               np.asarray(ref_vis, np.float32), atol=2e-2, rtol=2e-2)
    np.testing.assert_allclose(np.asarray(out_text_single, np.float32),
                               np.asarray(ref_text, np.float32), atol=2e-2, rtol=2e-2)
    print("KERNEL_OK")
</pallas_src>

<mosaic_0001>
module attributes {stable_mosaic.version = 11 : i64} {
  func.func @vnet_kernel(%arg0: i32, %arg1: memref<1x1x512xbf16, #tpu.memory_space<vmem>>, %arg2: memref<1x512x128xbf16, #tpu.memory_space<vmem>>, %arg3: memref<1x1x128xf32, #tpu.memory_space<vmem>>, %arg4: memref<1x128x256xbf16, #tpu.memory_space<vmem>>, %arg5: memref<1x1x256xf32, #tpu.memory_space<vmem>>, %arg6: memref<1x1x256xbf16, #tpu.memory_space<vmem>>) attributes {dimension_semantics = [#tpu.dimension_semantics<parallel>], iteration_bounds = array<i64: 2>, scalar_prefetch = 0 : i64, scratch_operands = 0 : i64, tpu.core_type = #tpu.core_type<tc>, window_params = [{transform_indices = @transform_0, window_bounds = array<i64: 1, 1, 512>}, {transform_indices = @transform_1, window_bounds = array<i64: 1, 512, 128>}, {transform_indices = @transform_2, window_bounds = array<i64: 1, 1, 128>}, {transform_indices = @transform_3, window_bounds = array<i64: 1, 128, 256>}, {transform_indices = @transform_4, window_bounds = array<i64: 1, 1, 256>}, {transform_indices = @transform_5, window_bounds = array<i64: 1, 1, 256>}]} {
    %c0 = arith.constant 0 : index
    %c0_0 = arith.constant 0 : index
    %c0_1 = arith.constant 0 : index
    %0 = vector.load %arg1[%c0, %c0_0, %c0_1] : memref<1x1x512xbf16, #tpu.memory_space<vmem>>, vector<1x1x512xbf16>
    %1 = vector.shape_cast %0 : vector<1x1x512xbf16> to vector<1x512xbf16>
    %c0_2 = arith.constant 0 : index
    %c0_3 = arith.constant 0 : index
    %c0_4 = arith.constant 0 : index
    %2 = vector.load %arg2[%c0_2, %c0_3, %c0_4] : memref<1x512x128xbf16, #tpu.memory_space<vmem>>, vector<1x512x128xbf16>
    %3 = vector.shape_cast %2 : vector<1x512x128xbf16> to vector<512x128xbf16>
    %cst = arith.constant dense<0.000000e+00> : vector<1x128xf32>
    %4 = tpu.matmul %1, %3, %cst {dimension_numbers = #tpu.dot_dimension_numbers<[1], [0], [0], [1], [0, 0, 1, 1], [], []>} : vector<1x512xbf16>, vector<512x128xbf16>, vector<1x128xf32> -> vector<1x128xf32>
    %c0_5 = arith.constant 0 : index
    %c0_6 = arith.constant 0 : index
    %c0_7 = arith.constant 0 : index
    %5 = vector.load %arg3[%c0_5, %c0_6, %c0_7] : memref<1x1x128xf32, #tpu.memory_space<vmem>>, vector<1x1x128xf32>
    %6 = vector.shape_cast %5 : vector<1x1x128xf32> to vector<1x128xf32>
    %7 = arith.addf %4, %6 : vector<1x128xf32>
    %8 = arith.negf %7 : vector<1x128xf32>
    %9 = math.exp %8 : vector<1x128xf32>
    %cst_8 = arith.constant 1.000000e+00 : f32
    %10 = vector.broadcast %cst_8 : f32 to vector<1x128xf32>
    %11 = arith.addf %10, %9 : vector<1x128xf32>
    %12 = arith.divf %10, %11 : vector<1x128xf32>
    %13 = arith.truncf %12 : vector<1x128xf32> to vector<1x128xbf16>
    %c0_9 = arith.constant 0 : index
    %c0_10 = arith.constant 0 : index
    %c0_11 = arith.constant 0 : index
    %14 = vector.load %arg4[%c0_9, %c0_10, %c0_11] : memref<1x128x256xbf16, #tpu.memory_space<vmem>>, vector<1x128x256xbf16>
    %15 = vector.shape_cast %14 : vector<1x128x256xbf16> to vector<128x256xbf16>
    %cst_12 = arith.constant dense<0.000000e+00> : vector<1x256xf32>
    %16 = tpu.matmul %13, %15, %cst_12 {dimension_numbers = #tpu.dot_dimension_numbers<[1], [0], [0], [1], [0, 0, 1, 1], [], []>} : vector<1x128xbf16>, vector<128x256xbf16>, vector<1x256xf32> -> vector<1x256xf32>
    %c0_13 = arith.constant 0 : index
    %c0_14 = arith.constant 0 : index
    %c0_15 = arith.constant 0 : index
    %17 = vector.load %arg5[%c0_13, %c0_14, %c0_15] : memref<1x1x256xf32, #tpu.memory_space<vmem>>, vector<1x1x256xf32>
    %18 = vector.shape_cast %17 : vector<1x1x256xf32> to vector<1x256xf32>
    %19 = arith.addf %16, %18 : vector<1x256xf32>
    %20 = arith.negf %19 : vector<1x256xf32>
    %21 = math.exp %20 : vector<1x256xf32>
    %cst_16 = arith.constant 1.000000e+00 : f32
    %22 = vector.broadcast %cst_16 : f32 to vector<1x256xf32>
    %23 = arith.addf %22, %21 : vector<1x256xf32>
    %24 = arith.divf %22, %23 : vector<1x256xf32>
    %25 = vector.extract_strided_slice %1 {offsets = [0, 0], sizes = [1, 256], strides = [1, 1]} : vector<1x512xbf16> to vector<1x256xbf16>
    %26 = arith.extf %25 : vector<1x256xbf16> to vector<1x256xf32>
    %27 = vector.extract_strided_slice %1 {offsets = [0, 256], sizes = [1, 256], strides = [1, 1]} : vector<1x512xbf16> to vector<1x256xbf16>
    %28 = arith.extf %27 : vector<1x256xbf16> to vector<1x256xf32>
    %29 = arith.mulf %24, %28 : vector<1x256xf32>
    %cst_17 = arith.constant 2.000000e+00 : f32
    %30 = vector.broadcast %cst_17 : f32 to vector<1x256xf32>
    %31 = arith.mulf %29, %30 : vector<1x256xf32>
    %32 = arith.addf %26, %31 : vector<1x256xf32>
    %33 = arith.truncf %32 : vector<1x256xf32> to vector<1x256xbf16>
    %c0_18 = arith.constant 0 : index
    %c0_19 = arith.constant 0 : index
    %c0_20 = arith.constant 0 : index
    %34 = vector.load %arg6[%c0_18, %c0_19, %c0_20] : memref<1x1x256xbf16, #tpu.memory_space<vmem>>, vector<1x1x256xbf16>
    %35 = vector.shape_cast %34 : vector<1x1x256xbf16> to vector<1x256xbf16>
    %36 = vector.shape_cast %33 : vector<1x256xbf16> to vector<1x1x256xbf16>
    tpu.vector_store %arg6[%c0_18, %c0_19, %c0_20], %36 {strides = array<i32>} : memref<1x1x256xbf16, #tpu.memory_space<vmem>>, vector<1x1x256xbf16>,
    return
  }
  func.func @transform_0(%arg0: i32) -> (i32, i32, i32) {
    %c0_i32 = arith.constant 0 : i32
    %c0_i32_0 = arith.constant 0 : i32
    %c0_i32_1 = arith.constant 0 : i32
    return %arg0, %c0_i32, %c0_i32_0 : i32, i32, i32
  }
  func.func @transform_1(%arg0: i32) -> (i32, i32, i32) {
    %c0_i32 = arith.constant 0 : i32
    %c0_i32_0 = arith.constant 0 : i32
    %c0_i32_1 = arith.constant 0 : i32
    return %arg0, %c0_i32, %c0_i32_0 : i32, i32, i32
  }
  func.func @transform_2(%arg0: i32) -> (i32, i32, i32) {
    %c0_i32 = arith.constant 0 : i32
    %c0_i32_0 = arith.constant 0 : i32
    %c0_i32_1 = arith.constant 0 : i32
    return %arg0, %c0_i32, %c0_i32_0 : i32, i32, i32
  }
  func.func @transform_3(%arg0: i32) -> (i32, i32, i32) {
    %c0_i32 = arith.constant 0 : i32
    %c0_i32_0 = arith.constant 0 : i32
    %c0_i32_1 = arith.constant 0 : i32
    return %arg0, %c0_i32, %c0_i32_0 : i32, i32, i32
  }
  func.func @transform_4(%arg0: i32) -> (i32, i32, i32) {
    %c0_i32 = arith.constant 0 : i32
    %c0_i32_0 = arith.constant 0 : i32
    %c0_i32_1 = arith.constant 0 : i32
    return %arg0, %c0_i32, %c0_i32_0 : i32, i32, i32
  }
  func.func @transform_5(%arg0: i32) -> (i32, i32, i32) {
    %c0_i32 = arith.constant 0 : i32
    %c0_i32_0 = arith.constant 0 : i32
    %c0_i32_1 = arith.constant 0 : i32
    return %arg0, %c0_i32, %c0_i32_0 : i32, i32, i32
  }
}

</mosaic_0001>

<llo_original>
// kernel: tpu_custom_call.1
$region0: #{tpu_custom_call.1}
  #allocation0 [shape = 'u32[]', space=smem, size = 0x4, offset = 0x4, fixed_abs, tag = 'smem constant byte address 0x4 - core index']
  #allocation1 [shape = 'u32[72,128]{1,0:T(1,128)}', space=vmem, size = 0x9000, scoped, tag = 'internal scratch']
  %s0 = inlined_call_operand.vmem [shape: bf16[2,1,512], index: 0, kind: input, shape index: {}]
  %s1 = inlined_call_operand.hbm [shape: bf16[2,512,128], index: 1, kind: input, shape index: {}]
  %s2 = inlined_call_operand.vmem [shape: f32[2,1,128], index: 2, kind: input, shape index: {}]
  %s3 = inlined_call_operand.hbm [shape: bf16[2,128,256], index: 3, kind: input, shape index: {}]
  %s4 = inlined_call_operand.vmem [shape: f32[2,1,256], index: 4, kind: input, shape index: {}]
  %s5 = inlined_call_operand.vmem [shape: bf16[2,1,256], index: 5, kind: output, shape index: {}]
  %s6 = sld [smem:[#allocation0]]
  $region61: #{tpu_custom_call.1} parent=0
    _
  %s8 = ssub.s32 1, %s6
  %s9 = scalar_select 0, %s8, %s6
  $region1: #{tpu_custom_call.1} parent=0
    #allocation2 [shape = 'u8[262144]{0}', space=vmem, size = 0x40000, scoped, tag = 'input window, operand 1']
    #allocation3 [shape = 's32[2]{0}', space=sflag, size = 0x8, scoped, tag = 'scoped memory for tpu_custom_call.1']
    #allocation4 [shape = 'u8[131072]{0}', space=vmem, size = 0x20000, scoped, tag = 'input window, operand 3']
    #allocation5 [shape = 's32[2]{0}', space=sflag, size = 0x8, scoped, tag = 'scoped memory for tpu_custom_call.1']
    %10 = vsyncpa [#allocation3], 0
    %s11 = scalar_lea.sflag [#allocation3], 1
    %12 = vsyncpa %s11, 0
    %13 = vsyncpa [#allocation5], 0
    %s14 = scalar_lea.sflag [#allocation5], 1
    %15 = vsyncpa %s14, 0
    loop: start=0, step=1, limit=4
    $region2: #{tpu_custom_call.1} parent=1 // loop_pre_header
      _
    $region3: #{tpu_custom_call.1} parent=1 // loop_header
      %s17 = sphi 0, %s21
      %p18 = scmp.ge.s32.totalorder %s17, 4
      %s27 = sphi 0, %s29
      %s30 = sphi 0, %s27
      %s31 = sphi 0, %s30
      %s47 = sphi 0, %s31
      %s53 = sphi 0, %s55
      %s56 = sphi 0, %s53
      %s57 = sphi 0, %s56
      %s73 = sphi 0, %s57
      %s79 = sphi 0, %s81
      %s82 = sphi 0, %s79
      %s83 = sphi 0, %s82
      %s99 = sphi 0, %s83
      %s105 = sphi 0, %s107
      %s108 = sphi 0, %s105
      %s109 = sphi 0, %s108
      %s125 = sphi 0, %s109
      %s131 = sphi 0, %s133
      %s134 = sphi 0, %s131
      %s135 = sphi 0, %s134
      %s151 = sphi 0, %s135
      %s157 = sphi 0, %s159
      %s160 = sphi 0, %s157
      %s161 = sphi 0, %s160
      %s177 = sphi 0, %s161
    $region4: #{tpu_custom_call.1} parent=1 // loop_header_branch
      %20 = sbr.rel (%p18) target = $region8
    $region5: #{tpu_custom_call.1} parent=1 // loop_body
      %s22 = ssub.s32 %s17, 1
      %s23 = ssub.s32 %s17, 2
      %s24 = sadd.s32 %s17, 1
      %s25 = ssub.s32 %s17, %s24
      %p26 = scmp.eq.s32.totalorder %s25, 0
      %s28 = sadd.s32 %s27, 1
      %s29 = scalar_select %p26, %s27, %s28
      %p32 = pneg %p26
      %p33 = scmp.eq.s32.totalorder %s17, 1
      %p34 = por %p32, %p33
      %p35 = scmp.ne.s32.totalorder %s27, %s30
      %p36 = scmp.eq.s32.totalorder %s17, 0
      %p37 = por %p35, %p36
      %p38 = scmp.ne.s32.totalorder %s27, %s30
      %p39 = scmp.eq.s32.totalorder %s22, 1
      %p40 = por %p38, %p39
      %p41 = scmp.ne.s32.totalorder %s30, %s31
      %p42 = scmp.eq.s32.totalorder %s22, 0
      %p43 = por %p41, %p42
      %p44 = scmp.ne.s32.totalorder %s30, %s31
      %p45 = scmp.eq.s32.totalorder %s23, 1
      %p46 = por %p44, %p45
      %p48 = scmp.ne.s32.totalorder %s31, %s47
      %p49 = scmp.eq.s32.totalorder %s23, 0
      %p50 = por %p48, %p49
      %s51 = ssub.s32 %s17, %s24
      %p52 = scmp.eq.s32.totalorder %s51, 0
      %s54 = sadd.s32 %s53, 1
      %s55 = scalar_select %p52, %s53, %s54
      %p58 = pneg %p52
      %p59 = scmp.eq.s32.totalorder %s17, 1
      %p60 = por %p58, %p59
      %p61 = scmp.ne.s32.totalorder %s53, %s56
      %p62 = scmp.eq.s32.totalorder %s17, 0
      %p63 = por %p61, %p62
      %p64 = scmp.ne.s32.totalorder %s53, %s56
      %p65 = scmp.eq.s32.totalorder %s22, 1
      %p66 = por %p64, %p65
      %p67 = scmp.ne.s32.totalorder %s56, %s57
      %p68 = scmp.eq.s32.totalorder %s22, 0
      %p69 = por %p67, %p68
      %p70 = scmp.ne.s32.totalorder %s56, %s57
      %p71 = scmp.eq.s32.totalorder %s23, 1
      %p72 = por %p70, %p71
      %p74 = scmp.ne.s32.totalorder %s57, %s73
      %p75 = scmp.eq.s32.totalorder %s23, 0
      %p76 = por %p74, %p75
      %s77 = ssub.s32 %s17, %s24
      %p78 = scmp.eq.s32.totalorder %s77, 0
      %s80 = sadd.s32 %s79, 1
      %s81 = scalar_select %p78, %s79, %s80
      %p84 = pneg %p78
      %p85 = scmp.eq.s32.totalorder %s17, 1
      %p86 = por %p84, %p85
      %p87 = scmp.ne.s32.totalorder %s79, %s82
      %p88 = scmp.eq.s32.totalorder %s17, 0
      %p89 = por %p87, %p88
      %p90 = scmp.ne.s32.totalorder %s79, %s82
      %p91 = scmp.eq.s32.totalorder %s22, 1
      %p92 = por %p90, %p91
      %p93 = scmp.ne.s32.totalorder %s82, %s83
      %p94 = scmp.eq.s32.totalorder %s22, 0
      %p95 = por %p93, %p94
      %p96 = scmp.ne.s32.totalorder %s82, %s83
      %p97 = scmp.eq.s32.totalorder %s23, 1
      %p98 = por %p96, %p97
      %p100 = scmp.ne.s32.totalorder %s83, %s99
      %p101 = scmp.eq.s32.totalorder %s23, 0
      %p102 = por %p100, %p101
      %s103 = ssub.s32 %s17, %s24
      %p104 = scmp.eq.s32.totalorder %s103, 0
      %s106 = sadd.s32 %s105, 1
      %s107 = scalar_select %p104, %s105, %s106
      %p110 = pneg %p104
      %p111 = scmp.eq.s32.totalorder %s17, 1
      %p112 = por %p110, %p111
      %p113 = scmp.ne.s32.totalorder %s105, %s108
      %p114 = scmp.eq.s32.totalorder %s17, 0
      %p115 = por %p113, %p114
      %p116 = scmp.ne.s32.totalorder %s105, %s108
      %p117 = scmp.eq.s32.totalorder %s22, 1
      %p118 = por %p116, %p117
      %p119 = scmp.ne.s32.totalorder %s108, %s109
      %p120 = scmp.eq.s32.totalorder %s22, 0
      %p121 = por %p119, %p120
      %p122 = scmp.ne.s32.totalorder %s108, %s109
      %p123 = scmp.eq.s32.totalorder %s23, 1
      %p124 = por %p122, %p123
      %p126 = scmp.ne.s32.totalorder %s109, %s125
      %p127 = scmp.eq.s32.totalorder %s23, 0
      %p128 = por %p126, %p127
      %s129 = ssub.s32 %s17, %s24
      %p130 = scmp.eq.s32.totalorder %s129, 0
      %s132 = sadd.s32 %s131, 1
      %s133 = scalar_select %p130, %s131, %s132
      %p136 = pneg %p130
      %p137 = scmp.eq.s32.totalorder %s17, 1
      %p138 = por %p136, %p137
      %p139 = scmp.ne.s32.totalorder %s131, %s134
      %p140 = scmp.eq.s32.totalorder %s17, 0
      %p141 = por %p139, %p140
      %p142 = scmp.ne.s32.totalorder %s131, %s134
      %p143 = scmp.eq.s32.totalorder %s22, 1
      %p144 = por %p142, %p143
      %p145 = scmp.ne.s32.totalorder %s134, %s135
      %p146 = scmp.eq.s32.totalorder %s22, 0
      %p147 = por %p145, %p146
      %p148 = scmp.ne.s32.totalorder %s134, %s135
      %p149 = scmp.eq.s32.totalorder %s23, 1
      %p150 = por %p148, %p149
      %p152 = scmp.ne.s32.totalorder %s135, %s151
      %p153 = scmp.eq.s32.totalorder %s23, 0
      %p154 = por %p152, %p153
      %s155 = ssub.s32 %s17, %s24
      %p156 = scmp.eq.s32.totalorder %s155, 0
      %s158 = sadd.s32 %s157, 1
      %s159 = scalar_select %p156, %s157, %s158
      %p162 = pneg %p156
      %p163 = scmp.eq.s32.totalorder %s17, 1
      %p164 = por %p162, %p163
      %p165 = scmp.ne.s32.totalorder %s157, %s160
      %p166 = scmp.eq.s32.totalorder %s17, 0
      %p167 = por %p165, %p166
      %p168 = scmp.ne.s32.totalorder %s157, %s160
      %p169 = scmp.eq.s32.totalorder %s22, 1
      %p170 = por %p168, %p169
      %p171 = scmp.ne.s32.totalorder %s160, %s161
      %p172 = scmp.eq.s32.totalorder %s22, 0
      %p173 = por %p171, %p172
      %p174 = scmp.ne.s32.totalorder %s160, %s161
      %p175 = scmp.eq.s32.totalorder %s23, 1
      %p176 = por %p174, %p175
      %p178 = scmp.ne.s32.totalorder %s161, %s177
      %p179 = scmp.eq.s32.totalorder %s23, 0
      %p180 = por %p178, %p179
      %p181 = scmp.le.s32.totalorder 1, %s17
      %p182 = scmp.lt.s32.totalorder %s17, 3
      %p183 = pnand %p181, %p182
      %p184 = pneg %p183
      // Predicated region
      $region9: #{tpu_custom_call.1} parent=5 // pred_check
        _
      $region10: #{tpu_custom_call.1} parent=5 // pred_check_branch
        %186 = sbr.rel (%p183) target = $region12
      $region11: #{tpu_custom_call.1} parent=5 // pred_region
        %s187 = ssub.s32 %s17, 1
      $region12: #{tpu_custom_call.1} parent=5 // pred_fallthru
        _
      %p188 = scmp.lt.s32.totalorder %s17, 2
      // Predicated region
      $region13: #{tpu_custom_call.1} parent=5 // pred_check
        %p189 = pneg %p188
      $region14: #{tpu_custom_call.1} parent=5 // pred_check_branch
        %191 = sbr.rel (%p189) target = $region16
      $region15: #{tpu_custom_call.1} parent=5 // pred_region
        // Predicated region
        $region17: #{tpu_custom_call.1} parent=15 // pred_check
          %p192 = pneg %p37
        $region18: #{tpu_custom_call.1} parent=15 // pred_check_branch
          %194 = sbr.rel (%p192) target = $region20
        $region19: #{tpu_custom_call.1} parent=15 // pred_region
          %p195 = scmp.lt.s32.totalorder %s17, 1
          %s196 = scalar_select %p195, %s17, 1
          %s197 = smul.addr %s196, 4
          %s198 = scalar_lea.vmem %s0, %s197
        $region20: #{tpu_custom_call.1} parent=15 // pred_fallthru
          _
        // Predicated region
        $region21: #{tpu_custom_call.1} parent=15 // pred_check
          %p199 = pneg %p63
        $region22: #{tpu_custom_call.1} parent=15 // pred_check_branch
          %201 = sbr.rel (%p199) target = $region24
        $region23: #{tpu_custom_call.1} parent=15 // pred_region
          %s202 = sand.u32 %s53, 1
          %s203 = scalar_lea.sflag [#allocation3], %s202
          %s204 = sand.u32 %s53, 1
          %s205 = smul.addr %s204, 256
          %s206 = scalar_lea.vmem [#allocation2], %s205
          %208 = vsyncadd %s203, 0
          %s209 = smul.addr %s17, 64
          %s210 = smul.addr %s209, 4
          %s211 = scalar_lea.hbm %s1, %s210
          %s212 = sshll.u32 %s211, 4
          %s213 = int_to_ptr.hbm [resolvable:$true] %s212
          %s214 = sshll.u32 %s206, 4
          %s215 = int_to_ptr.vmem [resolvable:$true] %s214
          %220 = dma.hbm_to_vmem [thread:$0]  %s213, 4096, %s215, %s203, 64, 64, 4
        $region24: #{tpu_custom_call.1} parent=15 // pred_fallthru
          _
        // Predicated region
        $region25: #{tpu_custom_call.1} parent=15 // pred_check
          %p221 = pneg %p89
        $region26: #{tpu_custom_call.1} parent=15 // pred_check_branch
          %223 = sbr.rel (%p221) target = $region28
        $region27: #{tpu_custom_call.1} parent=15 // pred_region
          %p224 = scmp.lt.s32.totalorder %s17, 1
          %s225 = scalar_select %p224, %s17, 1
          %s226 = scalar_lea.vmem %s2, %s225
        $region28: #{tpu_custom_call.1} parent=15 // pred_fallthru
          _
        // Predicated region
        $region29: #{tpu_custom_call.1} parent=15 // pred_check
          %p227 = pneg %p115
        $region30: #{tpu_custom_call.1} parent=15 // pred_check_branch
          %229 = sbr.rel (%p227) target = $region32
        $region31: #{tpu_custom_call.1} parent=15 // pred_region
          %s230 = sand.u32 %s105, 1
          %s231 = scalar_lea.sflag [#allocation5], %s230
          %s232 = sand.u32 %s105, 1
          %s233 = smul.addr %s232, 128
          %s234 = scalar_lea.vmem [#allocation4], %s233
          %236 = vsyncadd %s231, 0
          %s237 = smul.addr %s17, 32
          %s238 = smul.addr %s237, 4
          %s239 = scalar_lea.hbm %s3, %s238
          %s240 = sshll.u32 %s239, 4
          %s241 = int_to_ptr.hbm [resolvable:$true] %s240
          %s242 = sshll.u32 %s234, 4
          %s243 = int_to_ptr.vmem [resolvable:$true] %s242
          %248 = dma.hbm_to_vmem [thread:$0]  %s241, 2048, %s243, %s231, 128, 128, 8
        $region32: #{tpu_custom_call.1} parent=15 // pred_fallthru
          _
        // Predicated region
        $region33: #{tpu_custom_call.1} parent=15 // pred_check
          %p249 = pneg %p141
        $region34: #{tpu_custom_call.1} parent=15 // pred_check_branch
          %251 = sbr.rel (%p249) target = $region36
        $region35: #{tpu_custom_call.1} parent=15 // pred_region
          %p252 = scmp.lt.s32.totalorder %s17, 1
          %s253 = scalar_select %p252, %s17, 1
          %s254 = smul.addr %s253, 2
          %s255 = scalar_lea.vmem %s4, %s254
        $region36: #{tpu_custom_call.1} parent=15 // pred_fallthru
          _
      $region16: #{tpu_custom_call.1} parent=5 // pred_fallthru
        _
      %p256 = scmp.le.s32.totalorder 1, %s17
      %p257 = scmp.lt.s32.totalorder %s17, 3
      %p258 = pnand %p256, %p257
      %p259 = pneg %p258
      // Predicated region
      $region37: #{tpu_custom_call.1} parent=5 // pred_check
        _
      $region38: #{tpu_custom_call.1} parent=5 // pred_check_branch
        %261 = sbr.rel (%p258) target = $region40
      $region39: #{tpu_custom_call.1} parent=5 // pred_region
        %s262 = ssub.s32 %s17, 1
        %s263 = sand.u32 %s56, 1
        %s264 = scalar_lea.sflag [#allocation3], %s263
        %s265 = sand.u32 %s56, 1
        %s266 = smul.addr %s265, 256
        %s267 = scalar_lea.vmem [#allocation2], %s266
        // Predicated region
        $region41: #{tpu_custom_call.1} parent=39 // pred_check
          %p268 = pneg %p69
        $region42: #{tpu_custom_call.1} parent=39 // pred_check_branch
          %270 = sbr.rel (%p268) target = $region44
        $region43: #{tpu_custom_call.1} parent=39 // pred_region
          %272 = dma.done %s264, 4096
        $region44: #{tpu_custom_call.1} parent=39 // pred_fallthru
          _
        %s273 = sand.u32 %s108, 1
        %s274 = scalar_lea.sflag [#allocation5], %s273
        %s275 = sand.u32 %s108, 1
        %s276 = smul.addr %s275, 128
        %s277 = scalar_lea.vmem [#allocation4], %s276
        // Predicated region
        $region45: #{tpu_custom_call.1} parent=39 // pred_check
          %p278 = pneg %p121
        $region46: #{tpu_custom_call.1} parent=39 // pred_check_branch
          %280 = sbr.rel (%p278) target = $region48
        $region47: #{tpu_custom_call.1} parent=39 // pred_region
          %282 = dma.done %s274, 2048
        $region48: #{tpu_custom_call.1} parent=39 // pred_fallthru
          _
        %p283 = scmp.lt.s32.totalorder %s22, 1
        %s284 = scalar_select %p283, %s22, 1
        %s285 = smul.addr %s284, 4
        %s286 = scalar_lea.vmem %s0, %s285
        %p287 = pneg %p43
        %p288 = pneg %p40
        %s289 = sand.u32 %s56, 1
        %s290 = scalar_lea.sflag [#allocation3], %s289
        %s291 = sand.u32 %s56, 1
        %s292 = smul.addr %s291, 256
        %s293 = scalar_lea.vmem [#allocation2], %s292
        %p294 = pneg %p69
        %p295 = pneg %p66
        %p296 = scmp.lt.s32.totalorder %s22, 1
        %s297 = scalar_select %p296, %s22, 1
        %s298 = scalar_lea.vmem %s2, %s297
        %p299 = pneg %p95
        %p300 = pneg %p92
        %s301 = sand.u32 %s108, 1
        %s302 = scalar_lea.sflag [#allocation5], %s301
        %s303 = sand.u32 %s108, 1
        %s304 = smul.addr %s303, 128
        %s305 = scalar_lea.vmem [#allocation4], %s304
        %p306 = pneg %p121
        %p307 = pneg %p118
        %p308 = scmp.lt.s32.totalorder %s22, 1
        %s309 = scalar_select %p308, %s22, 1
        %s310 = smul.addr %s309, 2
        %s311 = scalar_lea.vmem %s4, %s310
        %p312 = pneg %p147
        %p313 = pneg %p144
        %p314 = pneg %p173
        %p315 = pneg %p170
        %p316 = scmp.lt.s32.totalorder %s22, 1
        %s317 = scalar_select %p316, %s22, 1
        %s318 = smul.addr %s317, 2
        %s319 = scalar_lea.vmem %s5, %s318
        %p320 = scmp.lt.s32.totalorder %s22, 1
        %s321 = scalar_select %p320, %s22, 1
        %s322 = smul.addr %s321, 4
        %s323 = scalar_lea.vmem %s0, %s322
        %p324 = scmp.lt.s32.totalorder %s22, 1
        %s325 = scalar_select %p324, %s22, 1
        %s326 = scalar_lea.vmem %s2, %s325
        %p327 = scmp.lt.s32.totalorder %s22, 1
        %s328 = scalar_select %p327, %s22, 1
        %s329 = smul.addr %s328, 2
        %s330 = scalar_lea.vmem %s4, %s329
        %p331 = scmp.lt.s32.totalorder %s22, 1
        %s332 = scalar_select %p331, %s22, 1
        %s333 = smul.addr %s332, 2
        %s334 = scalar_lea.vmem %s5, %s333
        %v335 = vld [vmem:[%s323] sm:$0xf]
        %v336 = vld [vmem:[%s267] sm:$0xf]
        %v337 = vld [vmem:[%s267 + $0x4] sm:$0xf]
        %v338 = vld [vmem:[%s267 + $0x8] sm:$0xf]
        %v339 = vld [vmem:[%s267 + $0xc] sm:$0xf]
        %v340 = vld [vmem:[%s267 + $0x10] sm:$0xf]
        %v341 = vld [vmem:[%s267 + $0x14] sm:$0xf]
        %v342 = vld [vmem:[%s267 + $0x18] sm:$0xf]
        %v343 = vld [vmem:[%s267 + $0x1c] sm:$0xf]
        %v344 = vld [vmem:[%s267 + $0x20] sm:$0xf]
        %v345 = vld [vmem:[%s267 + $0x24] sm:$0xf]
        %v346 = vld [vmem:[%s267 + $0x28] sm:$0xf]
        %v347 = vld [vmem:[%s267 + $0x2c] sm:$0xf]
        %v348 = vld [vmem:[%s267 + $0x30] sm:$0xf]
        %v349 = vld [vmem:[%s267 + $0x34] sm:$0xf]
        %v350 = vld [vmem:[%s267 + $0x38] sm:$0xf]
        %v351 = vld [vmem:[%s267 + $0x3c] sm:$0xf]
        %v352 = vld [vmem:[%s267 + $0x40] sm:$0xf]
        %v353 = vld [vmem:[%s267 + $0x44] sm:$0xf]
        %v354 = vld [vmem:[%s267 + $0x48] sm:$0xf]
        %v355 = vld [vmem:[%s267 + $0x4c] sm:$0xf]
        %v356 = vld [vmem:[%s267 + $0x50] sm:$0xf]
        %v357 = vld [vmem:[%s267 + $0x54] sm:$0xf]
        %v358 = vld [vmem:[%s267 + $0x58] sm:$0xf]
        %v359 = vld [vmem:[%s267 + $0x5c] sm:$0xf]
        %v360 = vld [vmem:[%s267 + $0x60] sm:$0xf]
        %v361 = vld [vmem:[%s267 + $0x64] sm:$0xf]
        %v362 = vld [vmem:[%s267 + $0x68] sm:$0xf]
        %v363 = vld [vmem:[%s267 + $0x6c] sm:$0xf]
        %v364 = vld [vmem:[%s267 + $0x70] sm:$0xf]
        %v365 = vld [vmem:[%s267 + $0x74] sm:$0xf]
        %v366 = vld [vmem:[%s267 + $0x78] sm:$0xf]
        %v367 = vld [vmem:[%s267 + $0x7c] sm:$0xf]
        %v368 = vld [vmem:[%s267 + $0x80] sm:$0xf]
        %v369 = vld [vmem:[%s267 + $0x84] sm:$0xf]
        %v370 = vld [vmem:[%s267 + $0x88] sm:$0xf]
        %v371 = vld [vmem:[%s267 + $0x8c] sm:$0xf]
        %v372 = vld [vmem:[%s267 + $0x90] sm:$0xf]
        %v373 = vld [vmem:[%s267 + $0x94] sm:$0xf]
        %v374 = vld [vmem:[%s267 + $0x98] sm:$0xf]
        %v375 = vld [vmem:[%s267 + $0x9c] sm:$0xf]
        %v376 = vld [vmem:[%s267 + $0xa0] sm:$0xf]
        %v377 = vld [vmem:[%s267 + $0xa4] sm:$0xf]
        %v378 = vld [vmem:[%s267 + $0xa8] sm:$0xf]
        %v379 = vld [vmem:[%s267 + $0xac] sm:$0xf]
        %v380 = vld [vmem:[%s267 + $0xb0] sm:$0xf]
        %v381 = vld [vmem:[%s267 + $0xb4] sm:$0xf]
        %v382 = vld [vmem:[%s267 + $0xb8] sm:$0xf]
        %v383 = vld [vmem:[%s267 + $0xbc] sm:$0xf]
        %v384 = vld [vmem:[%s267 + $0xc0] sm:$0xf]
        %v385 = vld [vmem:[%s267 + $0xc4] sm:$0xf]
        %v386 = vld [vmem:[%s267 + $0xc8] sm:$0xf]
        %v387 = vld [vmem:[%s267 + $0xcc] sm:$0xf]
        %v388 = vld [vmem:[%s267 + $0xd0] sm:$0xf]
        %v389 = vld [vmem:[%s267 + $0xd4] sm:$0xf]
        %v390 = vld [vmem:[%s267 + $0xd8] sm:$0xf]
        %v391 = vld [vmem:[%s267 + $0xdc] sm:$0xf]
        %v392 = vld [vmem:[%s267 + $0xe0] sm:$0xf]
        %v393 = vld [vmem:[%s267 + $0xe4] sm:$0xf]
        %v394 = vld [vmem:[%s267 + $0xe8] sm:$0xf]
        %v395 = vld [vmem:[%s267 + $0xec] sm:$0xf]
        %v396 = vld [vmem:[%s267 + $0xf0] sm:$0xf]
        %v397 = vld [vmem:[%s267 + $0xf4] sm:$0xf]
        %v398 = vld [vmem:[%s267 + $0xf8] sm:$0xf]
        %v399 = vld [vmem:[%s267 + $0xfc] sm:$0xf]
        %v400 = vld [vmem:[%s326] sm:$0x1]
        %402 = vst [vmem:[#allocation1] ss:$9 sm:$0xff] %v335
        %v403 = vld [vmem:[#allocation1] sm:$0xff]
        %v404 = vld [vmem:[#allocation1 + $0x9] sm:$0xff]
        %v405 = vld [vmem:[#allocation1 + $0x12] sm:$0xff]
        %v406 = vld [vmem:[#allocation1 + $0x1b] sm:$0xff]
        %v475 = vunpack.c.l.b16 %v336
        %v476 = vunpack.c.l.b16 %v337
        %v477 = vunpack.c.l.b16 %v338
        %v478 = vunpack.c.l.b16 %v339
        %v479 = vunpack.c.l.b16 %v340
        %v480 = vunpack.c.l.b16 %v341
        %v481 = vunpack.c.l.b16 %v342
        %v482 = vunpack.c.l.b16 %v343
        %v483 = vunpack.c.l.b16 %v344
        %v484 = vunpack.c.l.b16 %v345
        %v485 = vunpack.c.l.b16 %v346
        %v486 = vunpack.c.l.b16 %v347
        %v487 = vunpack.c.l.b16 %v348
        %v488 = vunpack.c.l.b16 %v349
        %v489 = vunpack.c.l.b16 %v350
        %v490 = vunpack.c.l.b16 %v351
        %v491 = vunpack.c.l.b16 %v352
        %v492 = vunpack.c.l.b16 %v353
        %v493 = vunpack.c.l.b16 %v354
        %v494 = vunpack.c.l.b16 %v355
        %v495 = vunpack.c.l.b16 %v356
        %v496 = vunpack.c.l.b16 %v357
        %v497 = vunpack.c.l.b16 %v358
        %v498 = vunpack.c.l.b16 %v359
        %v499 = vunpack.c.l.b16 %v360
        %v500 = vunpack.c.l.b16 %v361
        %v501 = vunpack.c.l.b16 %v362
        %v502 = vunpack.c.l.b16 %v363
        %v503 = vunpack.c.l.b16 %v364
        %v504 = vunpack.c.l.b16 %v365
        %v505 = vunpack.c.l.b16 %v366
        %v506 = vunpack.c.l.b16 %v367
        %v507 = vunpack.c.l.b16 %v368
        %v508 = vunpack.c.l.b16 %v369
        %v509 = vunpack.c.l.b16 %v370
        %v510 = vunpack.c.l.b16 %v371
        %v511 = vunpack.c.l.b16 %v372
        %v512 = vunpack.c.l.b16 %v373
        %v513 = vunpack.c.l.b16 %v374
        %v514 = vunpack.c.l.b16 %v375
        %v515 = vunpack.c.l.b16 %v376
        %v516 = vunpack.c.l.b16 %v377
        %v517 = vunpack.c.l.b16 %v378
        %v518 = vunpack.c.l.b16 %v379
        %v519 = vunpack.c.l.b16 %v380
        %v520 = vunpack.c.l.b16 %v381
        %v521 = vunpack.c.l.b16 %v382
        %v522 = vunpack.c.l.b16 %v383
        %v523 = vunpack.c.l.b16 %v384
        %v524 = vunpack.c.l.b16 %v385
        %v525 = vunpack.c.l.b16 %v386
        %v526 = vunpack.c.l.b16 %v387
        %v527 = vunpack.c.l.b16 %v388
        %v528 = vunpack.c.l.b16 %v389
        %v529 = vunpack.c.l.b16 %v390
        %v530 = vunpack.c.l.b16 %v391
        %v531 = vunpack.c.l.b16 %v392
        %v532 = vunpack.c.l.b16 %v393
        %v533 = vunpack.c.l.b16 %v394
        %v534 = vunpack.c.l.b16 %v395
        %v535 = vunpack.c.l.b16 %v396
        %v536 = vunpack.c.l.b16 %v397
        %v537 = vunpack.c.l.b16 %v398
        %v538 = vunpack.c.l.b16 %v399
        %v539 = vpack.c.b16 %v476, %v475
        %v540 = vpack.c.b16 %v478, %v477
        %v541 = vpack.c.b16 %v480, %v479
        %v542 = vpack.c.b16 %v482, %v481
        %v543 = vpack.c.b16 %v484, %v483
        %v544 = vpack.c.b16 %v486, %v485
        %v545 = vpack.c.b16 %v488, %v487
        %v546 = vpack.c.b16 %v490, %v489
        %v547 = vpack.c.b16 %v492, %v491
        %v548 = vpack.c.b16 %v494, %v493
        %v549 = vpack.c.b16 %v496, %v495
        %v550 = vpack.c.b16 %v498, %v497
        %v551 = vpack.c.b16 %v500, %v499
        %v552 = vpack.c.b16 %v502, %v501
        %v553 = vpack.c.b16 %v504, %v503
        %v554 = vpack.c.b16 %v506, %v505
        %v555 = vpack.c.b16 %v508, %v507
        %v556 = vpack.c.b16 %v510, %v509
        %v557 = vpack.c.b16 %v512, %v511
        %v558 = vpack.c.b16 %v514, %v513
        %v559 = vpack.c.b16 %v516, %v515
        %v560 = vpack.c.b16 %v518, %v517
        %v561 = vpack.c.b16 %v520, %v519
        %v562 = vpack.c.b16 %v522, %v521
        %v563 = vpack.c.b16 %v524, %v523
        %v564 = vpack.c.b16 %v526, %v525
        %v565 = vpack.c.b16 %v528, %v527
        %v566 = vpack.c.b16 %v530, %v529
        %v567 = vpack.c.b16 %v532, %v531
        %v568 = vpack.c.b16 %v534, %v533
        %v569 = vpack.c.b16 %v536, %v535
        %v570 = vpack.c.b16 %v538, %v537
        %603 = vmatpush.bf16.msra.mxu0 %v546
        %604 = vmatpush.bf16.msra.mxu0 %v545
        %605 = vmatpush.bf16.msra.mxu0 %v544
        %606 = vmatpush.bf16.msra.mxu0 %v543
        %607 = vmatpush.bf16.msra.mxu0 %v542
        %608 = vmatpush.bf16.msra.mxu0 %v541
        %609 = vmatpush.bf16.msra.mxu0 %v540
        %610 = vmatpush.bf16.msra.mxu0 %v539
        %611 = vmatmul.bf16.gmra.mxu0 %v403
        %v612 = vpop.f32.mrf.mxu0
        %v613 = vadd.f32 %v400, %v612
        %v614 = vpop.f32.mrf.mxu0
        %615 = vdwg.mxu0
        %616 = vmatpush.bf16.msra.mxu0 %v554
        %617 = vmatpush.bf16.msra.mxu0 %v553
        %618 = vmatpush.bf16.msra.mxu0 %v552
        %619 = vmatpush.bf16.msra.mxu0 %v551
        %620 = vmatpush.bf16.msra.mxu0 %v550
        %621 = vmatpush.bf16.msra.mxu0 %v549
        %622 = vmatpush.bf16.msra.mxu0 %v548
        %623 = vmatpush.bf16.msra.mxu0 %v547
        %624 = vmatmul.bf16.gmra.mxu0 %v404
        %v625 = vpop.f32.mrf.mxu0
        %v626 = vadd.f32 %v613, %v625
        %v627 = vpop.f32.mrf.mxu0
        %628 = vdwg.mxu0
        %629 = vmatpush.bf16.msra.mxu0 %v562
        %630 = vmatpush.bf16.msra.mxu0 %v561
        %631 = vmatpush.bf16.msra.mxu0 %v560
        %632 = vmatpush.bf16.msra.mxu0 %v559
        %633 = vmatpush.bf16.msra.mxu0 %v558
        %634 = vmatpush.bf16.msra.mxu0 %v557
        %635 = vmatpush.bf16.msra.mxu0 %v556
        %636 = vmatpush.bf16.msra.mxu0 %v555
        %637 = vmatmul.bf16.gmra.mxu0 %v405
        %v638 = vpop.f32.mrf.mxu0
        %v639 = vadd.f32 %v626, %v638
        %v640 = vpop.f32.mrf.mxu0
        %641 = vdwg.mxu0
        %642 = vmatpush.bf16.msra.mxu0 %v570
        %643 = vmatpush.bf16.msra.mxu0 %v569
        %644 = vmatpush.bf16.msra.mxu0 %v568
        %645 = vmatpush.bf16.msra.mxu0 %v567
        %646 = vmatpush.bf16.msra.mxu0 %v566
        %647 = vmatpush.bf16.msra.mxu0 %v565
        %648 = vmatpush.bf16.msra.mxu0 %v564
        %649 = vmatpush.bf16.msra.mxu0 %v563
        %650 = vmatmul.bf16.gmra.mxu0 %v406
        %v651 = vpop.f32.mrf.mxu0
        %v652 = vadd.f32 %v639, %v651
        %v653 = vpop.f32.mrf.mxu0
        %654 = vdwg.mxu0
        %v655 = vxor.u32 %v652, 2147483648
        %v656 = vmul.f32 %v655, 1.442695
        %v657 = vpow.pop %v656
        %v658 = vadd.f32 %v657, 1.0
        %v659 = vrcp.pop %v658
        %v660 = vmul.f32 %v658, %v659
        %v661 = vsub.f32 1.0, %v660
        %v662 = vmul.f32 %v659, %v661
        %v663 = vadd.f32 %v659, %v662
        %vm664 = vweird.f32 %v658
        %vm665 = vweird.f32 %v659
        %vm666 = vmor %vm664, %vm665
        %v667 = vsel %vm666, %v659, %v663
        %v668 = vand.u32 2147483647, %v658
        %vm669 = vcmp.eq.f32.partialorder %v668, 8.507059e+37
        %v670 = vand.u32 %v658, 2147483648
        %v671 = vor.u32 1.1754944e-38, %v670
        %v672 = vsel %vm669, %v671, %v667
        %v673 = vmul.f32 1.0, %v672
        %v674 = vpack.c.bf16 %v673, %v673
        %v675 = vld [vmem:[%s277] sm:$0xff]
        %v676 = vld [vmem:[%s277 + $0x8] sm:$0xff]
        %v677 = vld [vmem:[%s277 + $0x10] sm:$0xff]
        %v678 = vld [vmem:[%s277 + $0x18] sm:$0xff]
        %v679 = vld [vmem:[%s277 + $0x20] sm:$0xff]
        %v680 = vld [vmem:[%s277 + $0x28] sm:$0xff]
        %v681 = vld [vmem:[%s277 + $0x30] sm:$0xff]
        %v682 = vld [vmem:[%s277 + $0x38] sm:$0xff]
        %v683 = vld [vmem:[%s277 + $0x40] sm:$0xff]
        %v684 = vld [vmem:[%s277 + $0x48] sm:$0xff]
        %v685 = vld [vmem:[%s277 + $0x50] sm:$0xff]
        %v686 = vld [vmem:[%s277 + $0x58] sm:$0xff]
        %v687 = vld [vmem:[%s277 + $0x60] sm:$0xff]
        %v688 = vld [vmem:[%s277 + $0x68] sm:$0xff]
        %v689 = vld [vmem:[%s277 + $0x70] sm:$0xff]
        %v690 = vld [vmem:[%s277 + $0x78] sm:$0xff]
        %v691 = vld [vmem:[%s330] sm:$0x3]
        %v708 = vunpack.c.l.b16 %v675
        %v709 = vunpack.c.h.b16 %v675
        %v710 = vunpack.c.l.b16 %v676
        %v711 = vunpack.c.h.b16 %v676
        %v712 = vunpack.c.l.b16 %v677
        %v713 = vunpack.c.h.b16 %v677
        %v714 = vunpack.c.l.b16 %v678
        %v715 = vunpack.c.h.b16 %v678
        %v716 = vunpack.c.l.b16 %v679
        %v717 = vunpack.c.h.b16 %v679
        %v718 = vunpack.c.l.b16 %v680
        %v719 = vunpack.c.h.b16 %v680
        %v720 = vunpack.c.l.b16 %v681
        %v721 = vunpack.c.h.b16 %v681
        %v722 = vunpack.c.l.b16 %v682
        %v723 = vunpack.c.h.b16 %v682
        %v724 = vunpack.c.l.b16 %v683
        %v725 = vunpack.c.h.b16 %v683
        %v726 = vunpack.c.l.b16 %v684
        %v727 = vunpack.c.h.b16 %v684
        %v728 = vunpack.c.l.b16 %v685
        %v729 = vunpack.c.h.b16 %v685
        %v730 = vunpack.c.l.b16 %v686
        %v731 = vunpack.c.h.b16 %v686
        %v732 = vunpack.c.l.b16 %v687
        %v733 = vunpack.c.h.b16 %v687
        %v734 = vunpack.c.l.b16 %v688
        %v735 = vunpack.c.h.b16 %v688
        %v736 = vunpack.c.l.b16 %v689
        %v737 = vunpack.c.h.b16 %v689
        %v738 = vunpack.c.l.b16 %v690
        %v739 = vunpack.c.h.b16 %v690
        %v740 = vpack.c.b16 %v710, %v708
        %v741 = vpack.c.b16 %v711, %v709
        %v742 = vpack.c.b16 %v714, %v712
        %v743 = vpack.c.b16 %v715, %v713
        %v744 = vpack.c.b16 %v718, %v716
        %v745 = vpack.c.b16 %v719, %v717
        %v746 = vpack.c.b16 %v722, %v720
        %v747 = vpack.c.b16 %v723, %v721
        %v748 = vpack.c.b16 %v726, %v724
        %v749 = vpack.c.b16 %v727, %v725
        %v750 = vpack.c.b16 %v730, %v728
        %v751 = vpack.c.b16 %v731, %v729
        %v752 = vpack.c.b16 %v734, %v732
        %v753 = vpack.c.b16 %v735, %v733
        %v754 = vpack.c.b16 %v738, %v736
        %v755 = vpack.c.b16 %v739, %v737
        %v773 = vperm.slane %v691, 0
        %v774 = vperm.slane %v691, 1
        %777 = vmatpush.bf16.msra.mxu0 %v754
        %778 = vmatpush.bf16.msra.mxu0 %v752
        %779 = vmatpush.bf16.msra.mxu0 %v750
        %780 = vmatpush.bf16.msra.mxu0 %v748
        %781 = vmatpush.bf16.msra.mxu0 %v746
        %782 = vmatpush.bf16.msra.mxu0 %v744
        %783 = vmatpush.bf16.msra.mxu0 %v742
        %784 = vmatpush.bf16.msra.mxu0 %v740
        %785 = vmatmul.bf16.gmra.mxu0 %v674
        %v786 = vpop.f32.mrf.mxu0
        %v787 = vadd.f32 %v773, %v786
        %v788 = vpop.f32.mrf.mxu0
        %789 = vdwg.mxu0
        %790 = vmatpush.bf16.msra.mxu0 %v755
        %791 = vmatpush.bf16.msra.mxu0 %v753
        %792 = vmatpush.bf16.msra.mxu0 %v751
        %793 = vmatpush.bf16.msra.mxu0 %v749
        %794 = vmatpush.bf16.msra.mxu0 %v747
        %795 = vmatpush.bf16.msra.mxu0 %v745
        %796 = vmatpush.bf16.msra.mxu0 %v743
        %797 = vmatpush.bf16.msra.mxu0 %v741
        %798 = vmatmul.bf16.gmra.mxu0 %v674
        %v799 = vpop.f32.mrf.mxu0
        %v800 = vadd.f32 %v774, %v799
        %v801 = vpop.f32.mrf.mxu0
        %802 = vdwg.mxu0
        %v803 = vxor.u32 %v787, 2147483648
        %v804 = vxor.u32 %v800, 2147483648
        %v805 = vmul.f32 %v803, 1.442695
        %v806 = vpow.pop %v805
        %v807 = vmul.f32 %v804, 1.442695
        %v808 = vpow.pop %v807
        %v809 = vadd.f32 %v806, 1.0
        %v810 = vadd.f32 %v808, 1.0
        %v811 = vrcp.pop %v809
        %v812 = vmul.f32 %v809, %v811
        %v813 = vsub.f32 1.0, %v812
        %v814 = vmul.f32 %v811, %v813
        %v815 = vadd.f32 %v811, %v814
        %vm816 = vweird.f32 %v809
        %vm817 = vweird.f32 %v811
        %vm818 = vmor %vm816, %vm817
        %v819 = vsel %vm818, %v811, %v815
        %v820 = vand.u32 2147483647, %v809
        %vm821 = vcmp.eq.f32.partialorder %v820, 8.507059e+37
        %v822 = vand.u32 %v809, 2147483648
        %v823 = vor.u32 1.1754944e-38, %v822
        %v824 = vsel %vm821, %v823, %v819
        %v825 = vmul.f32 1.0, %v824
        %v826 = vrcp.pop %v810
        %v827 = vmul.f32 %v810, %v826
        %v828 = vsub.f32 1.0, %v827
        %v829 = vmul.f32 %v826, %v828
        %v830 = vadd.f32 %v826, %v829
        %vm831 = vweird.f32 %v810
        %vm832 = vweird.f32 %v826
        %vm833 = vmor %vm831, %vm832
        %v834 = vsel %vm833, %v826, %v830
        %v835 = vand.u32 2147483647, %v810
        %vm836 = vcmp.eq.f32.partialorder %v835, 8.507059e+37
        %v837 = vand.u32 %v810, 2147483648
        %v838 = vor.u32 1.1754944e-38, %v837
        %v839 = vsel %vm836, %v838, %v834
        %v840 = vmul.f32 1.0, %v839
        %v841 = vunpack.c.l.bf16 %v335
        %v843 = vrot.slane %v335, 2
        %v845 = vunpack.c.l.bf16 %v843
        %v847 = vperm.slane %v845, 0
        %v848 = vperm.slane %v845, 2
        %v851 = vmul.f32 %v825, %v847
        %v852 = vmul.f32 %v840, %v848
        %v853 = vmul.f32 %v851, 2.0
        %v854 = vmul.f32 %v852, 2.0
        %v857 = vrot.slane %v854, 6
        %vm858 = vcmask 1041408
        %v859 = vsel %vm858, %v853, %v857
        %v861 = vadd.f32 %v841, %v859
        %v863 = vperm.slane %v861, 0
        %v864 = vperm.slane %v861, 2
        %v867 = vpack.c.bf16 %v864, %v863
        %v869 = vrot.slane %v867, 3
        %vm870 = vcmask 1040384
        %v873 = vsel %vm870, %v867, %v869
        %vm875 = vcmask 1040384
        %vm876 = vsmask.f32 256
        %vm877 = vmand %vm875, %vm876
        %vm878 = vcmask 1041409
        %vm879 = vsmask.f32 1280
        %vm880 = vmand %vm878, %vm879
        %vm881 = vmor %vm880, %vm877
        %v882 = vld [vmem:[%s334] sm:$0x3]
        %v883 = vsel %vm881, %v873, %v882
        %884 = vst [vmem:[%s334] sm:$0x3] %v883
        %p885 = scmp.lt.s32.totalorder %s22, 1
        %s886 = scalar_select %p885, %s22, 1
        %s887 = smul.addr %s886, 2
        %s888 = scalar_lea.vmem %s5, %s887
        // Predicated region
        $region49: #{tpu_custom_call.1} parent=39 // pred_check
          %p889 = pneg %p170
        $region50: #{tpu_custom_call.1} parent=39 // pred_check_branch
          %891 = sbr.rel (%p889) target = $region52
        $region51: #{tpu_custom_call.1} parent=39 // pred_region
          _
        $region52: #{tpu_custom_call.1} parent=39 // pred_fallthru
          _
      $region40: #{tpu_custom_call.1} parent=5 // pred_fallthru
        _
      %p892 = scmp.le.s32.totalorder 2, %s17
      // Predicated region
      $region53: #{tpu_custom_call.1} parent=5 // pred_check
        %p893 = pneg %p892
      $region54: #{tpu_custom_call.1} parent=5 // pred_check_branch
        %895 = sbr.rel (%p893) target = $region56
      $region55: #{tpu_custom_call.1} parent=5 // pred_region
        %s896 = ssub.s32 %s17, 2
        // Predicated region
        $region57: #{tpu_custom_call.1} parent=55 // pred_check
          %p897 = pneg %p176
        $region58: #{tpu_custom_call.1} parent=55 // pred_check_branch
          %899 = sbr.rel (%p897) target = $region60
        $region59: #{tpu_custom_call.1} parent=55 // pred_region
          %p900 = scmp.lt.s32.totalorder %s23, 1
          %s901 = scalar_select %p900, %s23, 1
          %s902 = smul.addr %s901, 2
          %s903 = scalar_lea.vmem %s5, %s902
        $region60: #{tpu_custom_call.1} parent=55 // pred_fallthru
          _
      $region56: #{tpu_custom_call.1} parent=5 // pred_fallthru
        _
    $region6: #{tpu_custom_call.1} parent=1 // loop_footer
      %s21 = sadd.s32 1, %s17
    $region7: #{tpu_custom_call.1} parent=1 // loop_footer_branch
      %16 = sbr.rel target = $region3
    $region8: #{tpu_custom_call.1} parent=1 // loop_exit
      _
    %904 = vsyncpa [#allocation3], 1
    %s905 = scalar_lea.sflag [#allocation3], 1
    %906 = vsyncpa %s905, 1
    %907 = vsyncpa [#allocation5], 1
    %s908 = scalar_lea.sflag [#allocation5], 1
    %909 = vsyncpa %s908, 1

</llo_original>
